<compile_context>
chip_gen: v7x
topology: tpu7x:2x2x1
jax: 0.10.0
libtpu: 0.0.40
codegen_flags: <defaults>
</compile_context>

<pallas_src>
import functools

import jax
import jax.numpy as jnp
import numpy as np
from jax.experimental import pallas as pl
from jax.experimental.pallas import tpu as pltpu


def _round_up(x, m):
    return ((x + m - 1) // m) * m


def _ce_kernel(x_ref, w1_ref, b1_ref, w2_ref, b2_ref, w3_ref, b3_ref, o_ref):
    # x_ref : (TW, C*r) bf16      o_ref : (TW, 128) f32 (lane-dense)
    x = x_ref[...]

    # conv2d_1 (1, up_ratio) kernel -> matmul over flattened (c, k); f32 accumulate.
    y1 = jnp.dot(x, w1_ref[...], preferred_element_type=jnp.float32) + b1_ref[...]
    y1 = jnp.maximum(y1, 0.0)                                        # (TW, 64) f32

    # conv2d_2 (1x1) -> matmul (bf16 MXU, f32 accumulate).
    y2 = jnp.dot(y1.astype(w2_ref.dtype), w2_ref[...],
                 preferred_element_type=jnp.float32) + b2_ref[...]
    y2 = jnp.maximum(y2, 0.0)                                        # (TW, 128) f32

    # conv2d_3 (1x1) applied to both 64-channel halves at once via block_diag(w3, w3):
    # row w of the result is [y3(pos 2w), y3(pos 2w+1)] -- the channel reshuffle
    # becomes a free row-major reshape in the wrapper, and the store stays 128-lane dense.
    y3 = jnp.dot(y2.astype(w3_ref.dtype), w3_ref[...],
                 preferred_element_type=jnp.float32) + b3_ref[...]
    o_ref[...] = jnp.maximum(y3, 0.0)                                # (TW, 128) f32


def contract_expand(inputs, params, up_ratio, *, tile_rows=512,
                    compute_dtype=jnp.bfloat16):
    """inputs: (B, C, L) float32, L divisible by up_ratio. Returns (B, 64, 2*L//up_ratio)."""
    w1, b1, w2, b2, w3, b3 = params
    B, C, L = inputs.shape
    r = up_ratio
    W = L // r
    Cr = C * r
    BW = B * W

    # glue: rows layout x1[b*W + w, c*r + k] = inputs[b, c, k*W + w], fused with
    # the bf16 cast so it is a single HBM pass over the input.
    x1 = (inputs.reshape(B, C, r, W)
                .transpose(0, 3, 1, 2)
                .reshape(BW, Cr)
                .astype(compute_dtype))

    # Row tile: multiple of 16 (bf16 sublane packing), bounded by the problem size.
    TW = min(int(tile_rows), _round_up(BW, 16))
    TW = max(16, _round_up(TW, 16))
    BWp = _round_up(BW, TW)
    if BWp != BW:
        x1 = jnp.concatenate([x1, jnp.zeros((BWp - BW, Cr), x1.dtype)], axis=0)

    # glue: conv weights as right-multiplied matmul operands (bf16); biases f32.
    w1t = w1.reshape(64, Cr).T.astype(compute_dtype)                 # (Cr, 64)
    w2t = w2.reshape(128, 64).T.astype(compute_dtype)                # (64, 128)
    w3t = w3.reshape(64, 64).T                                       # (64, 64)
    w3blk = jnp.zeros((128, 128), w3t.dtype)
    w3blk = w3blk.at[:64, :64].set(w3t).at[64:, 64:].set(w3t)
    w3blk = w3blk.astype(compute_dtype)                              # (128, 128)
    b1r = b1.reshape(1, 64).astype(jnp.float32)
    b2r = b2.reshape(1, 128).astype(jnp.float32)
    b3r = jnp.concatenate([b3, b3]).reshape(1, 128).astype(jnp.float32)

    grid = (BWp // TW,)
    itemsize = jnp.dtype(compute_dtype).itemsize
    flops = 2 * BWp * (Cr * 64 + 64 * 128 + 128 * 128)
    bytes_accessed = (BWp * Cr * itemsize
                      + (w1t.size + w2t.size + w3blk.size) * itemsize
                      + (b1r.size + b2r.size + b3r.size) * 4
                      + BWp * 128 * 4)

    y = pl.pallas_call(
        _ce_kernel,
        out_shape=jax.ShapeDtypeStruct((BWp, 128), jnp.float32),
        grid_spec=pltpu.PrefetchScalarGridSpec(
            num_scalar_prefetch=0,
            grid=grid,
            in_specs=[
                pl.BlockSpec((TW, Cr), lambda i: (i, 0)),
                pl.BlockSpec((Cr, 64), lambda i: (0, 0)),
                pl.BlockSpec((1, 64), lambda i: (0, 0)),
                pl.BlockSpec((64, 128), lambda i: (0, 0)),
                pl.BlockSpec((1, 128), lambda i: (0, 0)),
                pl.BlockSpec((128, 128), lambda i: (0, 0)),
                pl.BlockSpec((1, 128), lambda i: (0, 0)),
            ],
            out_specs=pl.BlockSpec((TW, 128), lambda i: (i, 0)),
        ),
        compiler_params=pltpu.CompilerParams(
            dimension_semantics=("parallel",),
            vmem_limit_bytes=32 * 1024 * 1024,
        ),
        cost_estimate=pl.CostEstimate(flops=flops, transcendentals=0,
                                      bytes_accessed=bytes_accessed),
    )(x1, w1t, b1r, w2t, b2r, w3blk, b3r)

    # glue: (BW, 128) -> (B, 2W, 64) is a free row-major view; final transpose to
    # the PyTorch (B, 64, 2W) layout is one HBM pass over the (small) output.
    # TODO(synk): if the consumer accepts (B, 2W, 64), drop this transpose entirely.
    y = y[:BW].reshape(B, 2 * W, 64)
    return y.transpose(0, 2, 1)


def contract_expand_ref(inputs, params, up_ratio):
    """Pure-JAX f32 reference mirroring the PyTorch forward, for validation."""
    w1, b1, w2, b2, w3, b3 = params
    B, C, L = inputs.shape
    r = up_ratio
    W = L // r
    net = inputs.reshape(B, C, r, W).transpose(0, 1, 3, 2)           # (B, C, W, r)
    x = net.transpose(0, 2, 1, 3).reshape(B, W, C * r)               # (B, W, C*r)
    y1 = jax.nn.relu(x @ w1.reshape(64, C * r).T + b1)               # (B, W, 64)
    y2 = jax.nn.relu(y1 @ w2.reshape(128, 64).T + b2)                # (B, W, 128)
    y2r = y2.reshape(B, -1, 64)                                      # (B, 2W, 64)
    y3 = jax.nn.relu(y2r @ w3.reshape(64, 64).T + b3)                # (B, 2W, 64)
    return y3.transpose(0, 2, 1)                                     # (B, 64, 2W)


def init_params(key, num_input_channels, up_ratio):
    c, r = num_input_channels, up_ratio
    ks = jax.random.split(key, 6)

    def uinit(k, shape, fan_in):
        bound = 1.0 / np.sqrt(fan_in)
        return jax.random.uniform(k, shape, jnp.float32, -bound, bound)

    w1 = uinit(ks[0], (64, c, 1, r), c * r)
    b1 = uinit(ks[1], (64,), c * r)
    w2 = uinit(ks[2], (128, 64, 1, 1), 64)
    b2 = uinit(ks[3], (128,), 64)
    w3 = uinit(ks[4], (64, 64, 1, 1), 64)
    b3 = uinit(ks[5], (64,), 64)
    return (w1, b1, w2, b2, w3, b3)


if __name__ == "__main__":
    B, C, L = 2, 4, 16          # batch, num_input_channels, sequence length
    up_ratio = 2                # L = up_ratio * W with W = 8

    key = jax.random.PRNGKey(0)
    k_in, k_par = jax.random.split(key)
    inputs = jax.random.normal(k_in, (B, C, L), dtype=jnp.float32)
    params = init_params(k_par, C, up_ratio)

    fwd = jax.jit(functools.partial(contract_expand, up_ratio=up_ratio))
    out = jax.block_until_ready(fwd(inputs, params))

    ref = jax.block_until_ready(contract_expand_ref(inputs, params, up_ratio))
    assert out.shape == (B, 64, 2 * (L // up_ratio)), out.shape
    # bf16 MXU inputs with f32 accumulation: compare against the f32 reference
    # with a correspondingly looser tolerance.
    np.testing.assert_allclose(np.asarray(out), np.asarray(ref), rtol=5e-2, atol=5e-2)

    print("KERNEL_OK")
</pallas_src>

<mosaic_0001>
module attributes {stable_mosaic.version = 11 : i64} {
  func.func @_ce_kernel(%arg0: i32, %arg1: memref<16x8xbf16, #tpu.memory_space<vmem>>, %arg2: memref<8x64xbf16, #tpu.memory_space<vmem>>, %arg3: memref<1x64xf32, #tpu.memory_space<vmem>>, %arg4: memref<64x128xbf16, #tpu.memory_space<vmem>>, %arg5: memref<1x128xf32, #tpu.memory_space<vmem>>, %arg6: memref<128x128xbf16, #tpu.memory_space<vmem>>, %arg7: memref<1x128xf32, #tpu.memory_space<vmem>>, %arg8: memref<16x128xf32, #tpu.memory_space<vmem>>) attributes {dimension_semantics = [#tpu.dimension_semantics<parallel>], iteration_bounds = array<i64: 1>, scalar_prefetch = 0 : i64, scratch_operands = 0 : i64, tpu.core_type = #tpu.core_type<tc>, window_params = [{transform_indices = @transform_0, window_bounds = array<i64: 16, 8>}, {pipeline_mode = #tpu.pipeline_mode<synchronous>, transform_indices = @transform_1, window_bounds = array<i64: 8, 64>}, {pipeline_mode = #tpu.pipeline_mode<synchronous>, transform_indices = @transform_2, window_bounds = array<i64: 1, 64>}, {pipeline_mode = #tpu.pipeline_mode<synchronous>, transform_indices = @transform_3, window_bounds = array<i64: 64, 128>}, {pipeline_mode = #tpu.pipeline_mode<synchronous>, transform_indices = @transform_4, window_bounds = array<i64: 1, 128>}, {pipeline_mode = #tpu.pipeline_mode<synchronous>, transform_indices = @transform_5, window_bounds = array<i64: 128, 128>}, {pipeline_mode = #tpu.pipeline_mode<synchronous>, transform_indices = @transform_6, window_bounds = array<i64: 1, 128>}, {transform_indices = @transform_7, window_bounds = array<i64: 16, 128>}]} {
    %c0 = arith.constant 0 : index
    %c0_0 = arith.constant 0 : index
    %0 = vector.load %arg1[%c0, %c0_0] : memref<16x8xbf16, #tpu.memory_space<vmem>>, vector<16x8xbf16>
    %c0_1 = arith.constant 0 : index
    %c0_2 = arith.constant 0 : index
    %1 = vector.load %arg2[%c0_1, %c0_2] : memref<8x64xbf16, #tpu.memory_space<vmem>>, vector<8x64xbf16>
    %cst = arith.constant dense<0.000000e+00> : vector<16x64xf32>
    %2 = tpu.matmul %0, %1, %cst {dimension_numbers = #tpu.dot_dimension_numbers<[1], [0], [0], [1], [0, 0, 1, 1], [], []>} : vector<16x8xbf16>, vector<8x64xbf16>, vector<16x64xf32> -> vector<16x64xf32>
    %c0_3 = arith.constant 0 : index
    %c0_4 = arith.constant 0 : index
    %3 = vector.load %arg3[%c0_3, %c0_4] : memref<1x64xf32, #tpu.memory_space<vmem>>, vector<1x64xf32>
    %4 = vector.broadcast %3 : vector<1x64xf32> to vector<16x64xf32>
    %5 = arith.addf %2, %4 : vector<16x64xf32>
    %cst_5 = arith.constant 0.000000e+00 : f32
    %6 = vector.broadcast %cst_5 : f32 to vector<16x64xf32>
    %7 = arith.maximumf %5, %6 : vector<16x64xf32>
    %8 = arith.truncf %7 : vector<16x64xf32> to vector<16x64xbf16>
    %c0_6 = arith.constant 0 : index
    %c0_7 = arith.constant 0 : index
    %9 = vector.load %arg4[%c0_6, %c0_7] : memref<64x128xbf16, #tpu.memory_space<vmem>>, vector<64x128xbf16>
    %cst_8 = arith.constant dense<0.000000e+00> : vector<16x128xf32>
    %10 = tpu.matmul %8, %9, %cst_8 {dimension_numbers = #tpu.dot_dimension_numbers<[1], [0], [0], [1], [0, 0, 1, 1], [], []>} : vector<16x64xbf16>, vector<64x128xbf16>, vector<16x128xf32> -> vector<16x128xf32>
    %c0_9 = arith.constant 0 : index
    %c0_10 = arith.constant 0 : index
    %11 = vector.load %arg5[%c0_9, %c0_10] : memref<1x128xf32, #tpu.memory_space<vmem>>, vector<1x128xf32>
    %12 = vector.broadcast %11 : vector<1x128xf32> to vector<16x128xf32>
    %13 = arith.addf %10, %12 : vector<16x128xf32>
    %cst_11 = arith.constant 0.000000e+00 : f32
    %14 = vector.broadcast %cst_11 : f32 to vector<16x128xf32>
    %15 = arith.maximumf %13, %14 : vector<16x128xf32>
    %16 = arith.truncf %15 : vector<16x128xf32> to vector<16x128xbf16>
    %c0_12 = arith.constant 0 : index
    %c0_13 = arith.constant 0 : index
    %17 = vector.load %arg6[%c0_12, %c0_13] : memref<128x128xbf16, #tpu.memory_space<vmem>>, vector<128x128xbf16>
    %cst_14 = arith.constant dense<0.000000e+00> : vector<16x128xf32>
    %18 = tpu.matmul %16, %17, %cst_14 {dimension_numbers = #tpu.dot_dimension_numbers<[1], [0], [0], [1], [0, 0, 1, 1], [], []>} : vector<16x128xbf16>, vector<128x128xbf16>, vector<16x128xf32> -> vector<16x128xf32>
    %c0_15 = arith.constant 0 : index
    %c0_16 = arith.constant 0 : index
    %19 = vector.load %arg7[%c0_15, %c0_16] : memref<1x128xf32, #tpu.memory_space<vmem>>, vector<1x128xf32>
    %20 = vector.broadcast %19 : vector<1x128xf32> to vector<16x128xf32>
    %21 = arith.addf %18, %20 : vector<16x128xf32>
    %cst_17 = arith.constant 0.000000e+00 : f32
    %22 = vector.broadcast %cst_17 : f32 to vector<16x128xf32>
    %23 = arith.maximumf %21, %22 : vector<16x128xf32>
    %c0_18 = arith.constant 0 : index
    %c0_19 = arith.constant 0 : index
    %24 = vector.load %arg8[%c0_18, %c0_19] : memref<16x128xf32, #tpu.memory_space<vmem>>, vector<16x128xf32>
    tpu.vector_store %arg8[%c0_18, %c0_19], %23 {strides = array<i32>} : memref<16x128xf32, #tpu.memory_space<vmem>>, vector<16x128xf32>,
    return
  }
  func.func @transform_0(%arg0: i32) -> (i32, i32) {
    %c0_i32 = arith.constant 0 : i32
    %c0_i32_0 = arith.constant 0 : i32
    return %arg0, %c0_i32 : i32, i32
  }
  func.func @transform_1(%arg0: i32) -> (i32, i32) {
    %c0_i32 = arith.constant 0 : i32
    %c0_i32_0 = arith.constant 0 : i32
    %c0_i32_1 = arith.constant 0 : i32
    return %c0_i32, %c0_i32_0 : i32, i32
  }
  func.func @transform_2(%arg0: i32) -> (i32, i32) {
    %c0_i32 = arith.constant 0 : i32
    %c0_i32_0 = arith.constant 0 : i32
    %c0_i32_1 = arith.constant 0 : i32
    return %c0_i32, %c0_i32_0 : i32, i32
  }
  func.func @transform_3(%arg0: i32) -> (i32, i32) {
    %c0_i32 = arith.constant 0 : i32
    %c0_i32_0 = arith.constant 0 : i32
    %c0_i32_1 = arith.constant 0 : i32
    return %c0_i32, %c0_i32_0 : i32, i32
  }
  func.func @transform_4(%arg0: i32) -> (i32, i32) {
    %c0_i32 = arith.constant 0 : i32
    %c0_i32_0 = arith.constant 0 : i32
    %c0_i32_1 = arith.constant 0 : i32
    return %c0_i32, %c0_i32_0 : i32, i32
  }
  func.func @transform_5(%arg0: i32) -> (i32, i32) {
    %c0_i32 = arith.constant 0 : i32
    %c0_i32_0 = arith.constant 0 : i32
    %c0_i32_1 = arith.constant 0 : i32
    return %c0_i32, %c0_i32_0 : i32, i32
  }
  func.func @transform_6(%arg0: i32) -> (i32, i32) {
    %c0_i32 = arith.constant 0 : i32
    %c0_i32_0 = arith.constant 0 : i32
    %c0_i32_1 = arith.constant 0 : i32
    return %c0_i32, %c0_i32_0 : i32, i32
  }
  func.func @transform_7(%arg0: i32) -> (i32, i32) {
    %c0_i32 = arith.constant 0 : i32
    %c0_i32_0 = arith.constant 0 : i32
    return %arg0, %c0_i32 : i32, i32
  }
}

</mosaic_0001>

<llo_original>
// kernel: contract_expand.1
$region0: #{contract_expand.1}
  #allocation0 [shape = 'u32[]', space=smem, size = 0x4, offset = 0x4, fixed_abs, tag = 'smem constant byte address 0x4 - core index']
  #allocation1 [shape = 'u32[144,128]{1,0:T(1,128)}', space=vmem, size = 0x12000, scoped, tag = 'internal scratch']
  %s0 = inlined_call_operand.vmem [shape: bf16[16,8], index: 0, kind: input, shape index: {}]
  %s1 = inlined_call_operand.vmem [shape: bf16[8,64], index: 1, kind: input, shape index: {}]
  %s2 = inlined_call_operand.vmem [shape: f32[1,64], index: 2, kind: input, shape index: {}]
  %s3 = inlined_call_operand.vmem [shape: bf16[64,128], index: 3, kind: input, shape index: {}]
  %s4 = inlined_call_operand.vmem [shape: f32[1,128], index: 4, kind: input, shape index: {}]
  %s5 = inlined_call_operand.vmem [shape: bf16[128,128], index: 5, kind: input, shape index: {}]
  %s6 = inlined_call_operand.vmem [shape: f32[1,128], index: 6, kind: input, shape index: {}]
  %s7 = inlined_call_operand.vmem [shape: f32[16,128], index: 7, kind: output, shape index: {}]
  %s8 = sld [smem:[#allocation0]]
  $region38: #{contract_expand.1} parent=0
    _
  %s10 = ssub.s32 1, %s8
  %s11 = scalar_select 0, %s10, %s8
  // Predicated region
  $region2: #{contract_expand.1} parent=0 // pred_check
    _
  $region3: #{contract_expand.1} parent=0 // pred_check_branch
    %13 = sbr.rel (0) target = $region5
  $region4: #{contract_expand.1} parent=0 // pred_region
    _
  $region5: #{contract_expand.1} parent=0 // pred_fallthru
    _
  // Predicated region
  $region6: #{contract_expand.1} parent=0 // pred_check
    _
  $region7: #{contract_expand.1} parent=0 // pred_check_branch
    %15 = sbr.rel (0) target = $region9
  $region8: #{contract_expand.1} parent=0 // pred_region
    _
  $region9: #{contract_expand.1} parent=0 // pred_fallthru
    _
  // Predicated region
  $region10: #{contract_expand.1} parent=0 // pred_check
    _
  $region11: #{contract_expand.1} parent=0 // pred_check_branch
    %17 = sbr.rel (0) target = $region13
  $region12: #{contract_expand.1} parent=0 // pred_region
    _
  $region13: #{contract_expand.1} parent=0 // pred_fallthru
    _
  // Predicated region
  $region14: #{contract_expand.1} parent=0 // pred_check
    _
  $region15: #{contract_expand.1} parent=0 // pred_check_branch
    %19 = sbr.rel (0) target = $region17
  $region16: #{contract_expand.1} parent=0 // pred_region
    _
  $region17: #{contract_expand.1} parent=0 // pred_fallthru
    _
  // Predicated region
  $region18: #{contract_expand.1} parent=0 // pred_check
    _
  $region19: #{contract_expand.1} parent=0 // pred_check_branch
    %21 = sbr.rel (0) target = $region21
  $region20: #{contract_expand.1} parent=0 // pred_region
    _
  $region21: #{contract_expand.1} parent=0 // pred_fallthru
    _
  // Predicated region
  $region22: #{contract_expand.1} parent=0 // pred_check
    _
  $region23: #{contract_expand.1} parent=0 // pred_check_branch
    %23 = sbr.rel (0) target = $region25
  $region24: #{contract_expand.1} parent=0 // pred_region
    _
  $region25: #{contract_expand.1} parent=0 // pred_fallthru
    _
  // Predicated region
  $region26: #{contract_expand.1} parent=0 // pred_check
    _
  $region27: #{contract_expand.1} parent=0 // pred_check_branch
    %25 = sbr.rel (0) target = $region29
  $region28: #{contract_expand.1} parent=0 // pred_region
    _
  $region29: #{contract_expand.1} parent=0 // pred_fallthru
    _
  %v27 = vld [vmem:[%s0] sm:$0xf]
  %v28 = vld [vmem:[%s0 + $0x4] sm:$0xf]
  %v29 = vld [vmem:[%s1] sm:$0xf]
  %v30 = vld [vmem:[%s2] sm:$0x1]
  %v32 = vlaneseq
  %v33 = vshrl.u32 %v32, 7
  %v34 = vsub.s32 0, %v33
  %v35 = vrot.slane %v30, %v34
  %v39 = vunpack.c.l.b16 %v27
  %v40 = vunpack.c.l.b16 %v28
  %v41 = vpack.c.b16 %v40, %v39
  %vm42 = vcmask 64512
  %v44 = vsel %vm42, %v41, 0
  %vm46 = vcmask 1043456
  %v48 = vsel %vm46, %v29, 0
  %50 = vmatprep.subr.bf16.mxu0 0
  %51 = vmatpush1.bf16.msra.mxu0 %v48
  %52 = vmatprep.subr.bf16.mxu0 0
  %53 = vmatpush1.bf16.msra.mxu0 0
  %54 = vmatprep.subr.bf16.mxu0 0
  %55 = vmatpush1.bf16.msra.mxu0 0
  %56 = vmatprep.subr.bf16.mxu0 0
  %57 = vmatpush1.bf16.msra.mxu0 0
  %58 = vmatprep.subr.bf16.mxu0 0
  %59 = vmatpush1.bf16.msra.mxu0 0
  %60 = vmatprep.subr.bf16.mxu0 0
  %61 = vmatpush1.bf16.msra.mxu0 0
  %62 = vmatprep.subr.bf16.mxu0 0
  %63 = vmatpush1.bf16.msra.mxu0 0
  %64 = vmatprep.subr.bf16.mxu0 0
  %65 = vmatpush1.bf16.msra.mxu0 0
  %66 = vmatprep.subr.bf16.mxu0 0
  %67 = vmatpush1.bf16.msra.mxu0 0
  %68 = vmatprep.subr.bf16.mxu0 0
  %69 = vmatpush1.bf16.msra.mxu0 0
  %70 = vmatprep.subr.bf16.mxu0 0
  %71 = vmatpush1.bf16.msra.mxu0 0
  %72 = vmatprep.subr.bf16.mxu0 0
  %73 = vmatpush1.bf16.msra.mxu0 0
  %74 = vmatprep.subr.bf16.mxu0 0
  %75 = vmatpush1.bf16.msra.mxu0 0
  %76 = vmatprep.subr.bf16.mxu0 0
  %77 = vmatpush1.bf16.msra.mxu0 0
  %78 = vmatprep.subr.bf16.mxu0 0
  %79 = vmatpush1.bf16.msra.mxu0 0
  %80 = vmatprep.subr.bf16.mxu0 0
  %81 = vmatpush1.bf16.msra.mxu0 0
  %82 = vmatprep.mubr.bf16.mxu0 0
  %83 = vmatmul.mubr.bf16.gmra.mrb[0].mxu0 %v44
  %v84 = vpop.f32.mrb[0].mxu0
  %v85 = vadd.f32 %v35, %v84
  %v86 = vpop.f32.mrb[0].mxu0
  %v87 = vpop.f32.mrb[0].mxu0
  %v88 = vadd.f32 %v35, %v87
  %v89 = vpop.f32.mrb[0].mxu0
  %90 = vdwg.mxu0
  %v91 = vmax.f32 %v85, 0.0
  %v92 = vmax.f32 %v88, 0.0
  %v93 = vpack.c.bf16 %v92, %v91
  %v94 = vld [vmem:[%s3] sm:$0xf]
  %v95 = vld [vmem:[%s3 + $0x4] sm:$0xf]
  %v96 = vld [vmem:[%s3 + $0x8] sm:$0xf]
  %v97 = vld [vmem:[%s3 + $0xc] sm:$0xf]
  %v98 = vld [vmem:[%s3 + $0x10] sm:$0xf]
  %v99 = vld [vmem:[%s3 + $0x14] sm:$0xf]
  %v100 = vld [vmem:[%s3 + $0x18] sm:$0xf]
  %v101 = vld [vmem:[%s3 + $0x1c] sm:$0xf]
  %v102 = vld [vmem:[%s4] sm:$0x1]
  %v104 = vlaneseq
  %v105 = vshrl.u32 %v104, 7
  %v106 = vsub.s32 0, %v105
  %v107 = vrot.slane %v102, %v106
  %v117 = vunpack.c.l.b16 %v94
  %v118 = vunpack.c.l.b16 %v95
  %v119 = vunpack.c.l.b16 %v96
  %v120 = vunpack.c.l.b16 %v97
  %v121 = vunpack.c.l.b16 %v98
  %v122 = vunpack.c.l.b16 %v99
  %v123 = vunpack.c.l.b16 %v100
  %v124 = vunpack.c.l.b16 %v101
  %v125 = vpack.c.b16 %v118, %v117
  %v126 = vpack.c.b16 %v120, %v119
  %v127 = vpack.c.b16 %v122, %v121
  %v128 = vpack.c.b16 %v124, %v123
  %vm133 = vcmask 523264
  %v135 = vsel %vm133, %v93, 0
  %137 = vmatprep.subr.bf16.mxu0 0
  %138 = vmatpush1.bf16.msra.mxu0 %v125
  %139 = vmatprep.subr.bf16.mxu0 0
  %140 = vmatpush1.bf16.msra.mxu0 %v126
  %141 = vmatprep.subr.bf16.mxu0 0
  %142 = vmatpush1.bf16.msra.mxu0 %v127
  %143 = vmatprep.subr.bf16.mxu0 0
  %144 = vmatpush1.bf16.msra.mxu0 %v128
  %145 = vmatprep.subr.bf16.mxu0 0
  %146 = vmatpush1.bf16.msra.mxu0 0
  %147 = vmatprep.subr.bf16.mxu0 0
  %148 = vmatpush1.bf16.msra.mxu0 0
  %149 = vmatprep.subr.bf16.mxu0 0
  %150 = vmatpush1.bf16.msra.mxu0 0
  %151 = vmatprep.subr.bf16.mxu0 0
  %152 = vmatpush1.bf16.msra.mxu0 0
  %153 = vmatprep.subr.bf16.mxu0 0
  %154 = vmatpush1.bf16.msra.mxu0 0
  %155 = vmatprep.subr.bf16.mxu0 0
  %156 = vmatpush1.bf16.msra.mxu0 0
  %157 = vmatprep.subr.bf16.mxu0 0
  %158 = vmatpush1.bf16.msra.mxu0 0
  %159 = vmatprep.subr.bf16.mxu0 0
  %160 = vmatpush1.bf16.msra.mxu0 0
  %161 = vmatprep.subr.bf16.mxu0 0
  %162 = vmatpush1.bf16.msra.mxu0 0
  %163 = vmatprep.subr.bf16.mxu0 0
  %164 = vmatpush1.bf16.msra.mxu0 0
  %165 = vmatprep.subr.bf16.mxu0 0
  %166 = vmatpush1.bf16.msra.mxu0 0
  %167 = vmatprep.subr.bf16.mxu0 0
  %168 = vmatpush1.bf16.msra.mxu0 0
  %169 = vmatprep.mubr.bf16.mxu0 0
  %170 = vmatmul.mubr.bf16.gmra.mrb[0].mxu0 %v135
  %v171 = vpop.f32.mrb[0].mxu0
  %v172 = vadd.f32 %v107, %v171
  %v173 = vpop.f32.mrb[0].mxu0
  %v174 = vpop.f32.mrb[0].mxu0
  %v175 = vadd.f32 %v107, %v174
  %v176 = vpop.f32.mrb[0].mxu0
  %177 = vdwg.mxu0
  %v178 = vmax.f32 %v172, 0.0
  %v179 = vmax.f32 %v175, 0.0
  %v180 = vpack.c.bf16 %v179, %v178
  %v181 = vld [vmem:[%s5] sm:$0xf]
  %v182 = vld [vmem:[%s5 + $0x4] sm:$0xf]
  %v183 = vld [vmem:[%s5 + $0x8] sm:$0xf]
  %v184 = vld [vmem:[%s5 + $0xc] sm:$0xf]
  %v185 = vld [vmem:[%s5 + $0x10] sm:$0xf]
  %v186 = vld [vmem:[%s5 + $0x14] sm:$0xf]
  %v187 = vld [vmem:[%s5 + $0x18] sm:$0xf]
  %v188 = vld [vmem:[%s5 + $0x1c] sm:$0xf]
  %v189 = vld [vmem:[%s5 + $0x20] sm:$0xf]
  %v190 = vld [vmem:[%s5 + $0x24] sm:$0xf]
  %v191 = vld [vmem:[%s5 + $0x28] sm:$0xf]
  %v192 = vld [vmem:[%s5 + $0x2c] sm:$0xf]
  %v193 = vld [vmem:[%s5 + $0x30] sm:$0xf]
  %v194 = vld [vmem:[%s5 + $0x34] sm:$0xf]
  %v195 = vld [vmem:[%s5 + $0x38] sm:$0xf]
  %v196 = vld [vmem:[%s5 + $0x3c] sm:$0xf]
  %v197 = vld [vmem:[%s6] sm:$0x1]
  %v199 = vlaneseq
  %v200 = vshrl.u32 %v199, 7
  %v201 = vsub.s32 0, %v200
  %v202 = vrot.slane %v197, %v201
  %v220 = vunpack.c.l.b16 %v181
  %v221 = vunpack.c.l.b16 %v182
  %v222 = vunpack.c.l.b16 %v183
  %v223 = vunpack.c.l.b16 %v184
  %v224 = vunpack.c.l.b16 %v185
  %v225 = vunpack.c.l.b16 %v186
  %v226 = vunpack.c.l.b16 %v187
  %v227 = vunpack.c.l.b16 %v188
  %v228 = vunpack.c.l.b16 %v189
  %v229 = vunpack.c.l.b16 %v190
  %v230 = vunpack.c.l.b16 %v191
  %v231 = vunpack.c.l.b16 %v192
  %v232 = vunpack.c.l.b16 %v193
  %v233 = vunpack.c.l.b16 %v194
  %v234 = vunpack.c.l.b16 %v195
  %v235 = vunpack.c.l.b16 %v196
  %v236 = vpack.c.b16 %v221, %v220
  %v237 = vpack.c.b16 %v223, %v222
  %v238 = vpack.c.b16 %v225, %v224
  %v239 = vpack.c.b16 %v227, %v226
  %v240 = vpack.c.b16 %v229, %v228
  %v241 = vpack.c.b16 %v231, %v230
  %v242 = vpack.c.b16 %v233, %v232
  %v243 = vpack.c.b16 %v235, %v234
  %252 = vmatprep.subr.bf16.mxu0 0
  %253 = vmatpush1.bf16.msra.mxu0 %v236
  %254 = vmatprep.subr.bf16.mxu0 0
  %255 = vmatpush1.bf16.msra.mxu0 %v237
  %256 = vmatprep.subr.bf16.mxu0 0
  %257 = vmatpush1.bf16.msra.mxu0 %v238
  %258 = vmatprep.subr.bf16.mxu0 0
  %259 = vmatpush1.bf16.msra.mxu0 %v239
  %260 = vmatprep.subr.bf16.mxu0 0
  %261 = vmatpush1.bf16.msra.mxu0 %v240
  %262 = vmatprep.subr.bf16.mxu0 0
  %263 = vmatpush1.bf16.msra.mxu0 %v241
  %264 = vmatprep.subr.bf16.mxu0 0
  %265 = vmatpush1.bf16.msra.mxu0 %v242
  %266 = vmatprep.subr.bf16.mxu0 0
  %267 = vmatpush1.bf16.msra.mxu0 %v243
  %268 = vmatprep.subr.bf16.mxu0 0
  %269 = vmatpush1.bf16.msra.mxu0 0
  %270 = vmatprep.subr.bf16.mxu0 0
  %271 = vmatpush1.bf16.msra.mxu0 0
  %272 = vmatprep.subr.bf16.mxu0 0
  %273 = vmatpush1.bf16.msra.mxu0 0
  %274 = vmatprep.subr.bf16.mxu0 0
  %275 = vmatpush1.bf16.msra.mxu0 0
  %276 = vmatprep.subr.bf16.mxu0 0
  %277 = vmatpush1.bf16.msra.mxu0 0
  %278 = vmatprep.subr.bf16.mxu0 0
  %279 = vmatpush1.bf16.msra.mxu0 0
  %280 = vmatprep.subr.bf16.mxu0 0
  %281 = vmatpush1.bf16.msra.mxu0 0
  %282 = vmatprep.subr.bf16.mxu0 0
  %283 = vmatpush1.bf16.msra.mxu0 0
  %284 = vmatprep.mubr.bf16.mxu0 0
  %285 = vmatmul.mubr.bf16.gmra.mrb[0].mxu0 %v180
  %v286 = vpop.f32.mrb[0].mxu0
  %v287 = vadd.f32 %v202, %v286
  %v288 = vpop.f32.mrb[0].mxu0
  %v289 = vpop.f32.mrb[0].mxu0
  %v290 = vadd.f32 %v202, %v289
  %v291 = vpop.f32.mrb[0].mxu0
  %292 = vdwg.mxu0
  %v293 = vmax.f32 %v287, 0.0
  %v294 = vmax.f32 %v290, 0.0
  %295 = vst [vmem:[%s7] sm:$0xff] %v293
  %296 = vst [vmem:[%s7 + $0x8] sm:$0xff] %v294
  // Predicated region
  $region30: #{contract_expand.1} parent=0 // pred_check
    _
  $region31: #{contract_expand.1} parent=0 // pred_check_branch
    %298 = sbr.rel (0) target = $region33
  $region32: #{contract_expand.1} parent=0 // pred_region
    _
  $region33: #{contract_expand.1} parent=0 // pred_fallthru
    _
  // Predicated region
  $region34: #{contract_expand.1} parent=0 // pred_check
    _
  $region35: #{contract_expand.1} parent=0 // pred_check_branch
    %300 = sbr.rel (0) target = $region37
  $region36: #{contract_expand.1} parent=0 // pred_region
    _
  $region37: #{contract_expand.1} parent=0 // pred_fallthru
    _

</llo_original>
